<compile_context>
chip_gen: v6e
topology: v6e:2x2x1
jax: 0.10.0
libtpu: 0.0.40
codegen_flags: <defaults>
</compile_context>

<pallas_src>
import functools

import jax
import jax.numpy as jnp
from jax.experimental import pallas as pl
from jax.experimental.pallas import tpu as pltpu


# ----------------------------------------------------------------------------
# Helpers
# ----------------------------------------------------------------------------
def _round_up(x, m):
    return ((x + m - 1) // m) * m


def _pick_row_tile(n):
    # Largest row tile <= 256 that divides N and gives >= 2 grid steps
    # (enables pipelining + megacore sharding); otherwise one full block.
    # Capped at 256 so double-buffered (TQ, N) tiles stay inside v7x's VMEM.
    for t in (256, 128, 64, 32, 16, 8):
        if n % t == 0 and n // t >= 2:
            return t
    return n


def _vmem_limit(est_bytes):
    # Explicit scoped-VMEM request sized from the tiles (defaults are only
    # 16 MiB on v5e / 32 MiB on v6e, v7x).  Clamped to 64 MiB to fit v7x.
    return int(max(min(2 * est_bytes + (2 << 20), 64 << 20), 16 << 20))


def _elu(x):
    # Guard expm1 on the (discarded) positive branch so it never overflows.
    return jnp.where(x > 0, x, jnp.expm1(jnp.minimum(x, 0.0)))


# ----------------------------------------------------------------------------
# Kernel 1: Wh = h @ W  (optionally fused attention projections f1, f2)
# ----------------------------------------------------------------------------
def _wh_att_kernel(h_ref, w_ref, a12_ref, wh_ref, f1_ref, f2t_ref):
    wh = jnp.dot(h_ref[...], w_ref[...], preferred_element_type=jnp.float32)
    # Single fused (N, F_pad) x (F_pad, 2) matmul instead of two 1-wide matvecs.
    f12 = jnp.dot(wh, a12_ref[...], preferred_element_type=jnp.float32)
    wh_ref[...] = wh.astype(wh_ref.dtype)
    f1_ref[...] = f12[:, 0:1]
    f2t_ref[...] = f12[:, 1:2].T          # transpose once here, not per row tile


def _wh_kernel(h_ref, w_ref, wh_ref):
    wh = jnp.dot(h_ref[...], w_ref[...], preferred_element_type=jnp.float32)
    wh_ref[...] = wh.astype(wh_ref.dtype)


# ----------------------------------------------------------------------------
# Kernel 2a: attention path, row-tiled grid over nodes
# ----------------------------------------------------------------------------
def _att_kernel(f1_ref, f2t_ref, adj_ref, wh_ref, out_ref, *, alpha, concat):
    # e[i, j] = LeakyReLU(f1[i] + f2[j]); elementwise math stays in f32.
    e = f1_ref[...] + f2t_ref[...]                           # (TQ, N)
    e = jnp.where(e > 0, e, jnp.float32(alpha) * e)          # LeakyReLU(alpha)
    e = jnp.where(adj_ref[...] > 0, e, jnp.float32(-9e15))   # mask
    e = e - jnp.max(e, axis=1, keepdims=True)                # row-local softmax
    p = jnp.exp(e)
    row_sum = jnp.sum(p, axis=1, keepdims=True)              # (TQ, 1)
    # Deferred normalization: unnormalized p @ Wh (bf16 MXU, f32 acc), then
    # scale the (TQ, F) result by an approx reciprocal instead of N^2 divides.
    hp = jnp.dot(p.astype(wh_ref.dtype), wh_ref[...],
                 preferred_element_type=jnp.float32)
    hp = hp * pl.reciprocal(row_sum, approx=True)
    if concat:
        hp = _elu(hp)
    out_ref[...] = hp.astype(out_ref.dtype)
    # TODO(synk): training-mode F.dropout on the attention matrix is omitted
    # (eval-mode identity); would need pltpu.prng_* masking if training.


# ----------------------------------------------------------------------------
# Kernel 2b: do_att=False path (attention = adj)
# ----------------------------------------------------------------------------
def _noatt_kernel(adj_ref, wh_ref, out_ref, *, concat):
    hp = jnp.dot(adj_ref[...], wh_ref[...], preferred_element_type=jnp.float32)
    if concat:
        hp = _elu(hp)
    out_ref[...] = hp.astype(out_ref.dtype)


# ----------------------------------------------------------------------------
# Wrapper
# ----------------------------------------------------------------------------
def gat_forward(h, adj, W, a, *, alpha=0.2, concat=True, do_att=False):
    """Pallas implementation of GraphAttentionLayer.forward (eval mode)."""
    N, f_in = h.shape
    f_out = W.shape[1]
    fin_p = _round_up(f_in, 128)    # fill MXU contraction (v5e has 128-wide K)
    fout_p = _round_up(f_out, 128)  # lane-dense output / MXU N-dim

    # bf16 MXU inputs; accumulation stays in f32 inside the kernels.
    h_p = jnp.zeros((N, fin_p), jnp.bfloat16).at[:, :f_in].set(
        h.astype(jnp.bfloat16))
    W_p = jnp.zeros((fin_p, fout_p), jnp.bfloat16).at[:f_in, :f_out].set(
        W.astype(jnp.bfloat16))

    tq = _pick_row_tile(N)
    grid = (N // tq,)
    full2 = lambda: (0, 0)

    wh_shape = jax.ShapeDtypeStruct((N, fout_p), jnp.bfloat16)
    k1_vmem = _vmem_limit(N * fin_p * 2 + fin_p * fout_p * 2
                          + 6 * N * fout_p + 8 * N)

    if do_att:
        # Pack a1 = a[:f_out], a2 = a[f_out:] into one (F_pad, 2) matrix.
        a12 = jnp.zeros((fout_p, 2), jnp.float32)
        a12 = a12.at[:f_out, 0].set(a[:f_out, 0])
        a12 = a12.at[:f_out, 1].set(a[f_out:2 * f_out, 0])

        wh, f1, f2t = pl.pallas_call(
            _wh_att_kernel,
            out_shape=(wh_shape,
                       jax.ShapeDtypeStruct((N, 1), jnp.float32),
                       jax.ShapeDtypeStruct((1, N), jnp.float32)),
            in_specs=[pl.BlockSpec((N, fin_p), full2),
                      pl.BlockSpec((fin_p, fout_p), full2),
                      pl.BlockSpec((fout_p, 2), full2)],
            out_specs=(pl.BlockSpec((N, fout_p), full2),
                       pl.BlockSpec((N, 1), full2),
                       pl.BlockSpec((1, N), full2)),
            compiler_params=pltpu.CompilerParams(vmem_limit_bytes=k1_vmem),
        )(h_p, W_p, a12)

        est = (2 * tq * N * 4          # adj tiles (double buffered, f32 mask)
               + 2 * N * fout_p * 2    # Wh (bf16)
               + 2 * tq * fout_p * 4   # out tiles
               + 2 * (tq + N) * 4      # f1 / f2^T
               + 4 * tq * N * 4)       # e / p intermediates
        out_p = pl.pallas_call(
            functools.partial(_att_kernel, alpha=float(alpha),
                              concat=bool(concat)),
            out_shape=jax.ShapeDtypeStruct((N, fout_p), jnp.float32),
            grid=grid,
            in_specs=[pl.BlockSpec((tq, 1), lambda i: (i, 0)),
                      pl.BlockSpec((1, N), lambda i: (0, 0)),
                      pl.BlockSpec((tq, N), lambda i: (i, 0)),
                      pl.BlockSpec((N, fout_p), lambda i: (0, 0))],
            out_specs=pl.BlockSpec((tq, fout_p), lambda i: (i, 0)),
            compiler_params=pltpu.CompilerParams(
                dimension_semantics=("parallel",),   # 2 TCs on v7x
                vmem_limit_bytes=_vmem_limit(est)),
        )(f1, f2t, adj.astype(jnp.float32), wh)
    else:
        wh = pl.pallas_call(
            _wh_kernel,
            out_shape=wh_shape,
            in_specs=[pl.BlockSpec((N, fin_p), full2),
                      pl.BlockSpec((fin_p, fout_p), full2)],
            out_specs=pl.BlockSpec((N, fout_p), full2),
            compiler_params=pltpu.CompilerParams(vmem_limit_bytes=k1_vmem),
        )(h_p, W_p)

        est = (2 * tq * N * 2          # adj tiles (bf16)
               + 2 * N * fout_p * 2    # Wh
               + 4 * tq * fout_p * 4)  # out tiles + intermediate
        out_p = pl.pallas_call(
            functools.partial(_noatt_kernel, concat=bool(concat)),
            out_shape=jax.ShapeDtypeStruct((N, fout_p), jnp.float32),
            grid=grid,
            in_specs=[pl.BlockSpec((tq, N), lambda i: (i, 0)),
                      pl.BlockSpec((N, fout_p), lambda i: (0, 0))],
            out_specs=pl.BlockSpec((tq, fout_p), lambda i: (i, 0)),
            compiler_params=pltpu.CompilerParams(
                dimension_semantics=("parallel",),
                vmem_limit_bytes=_vmem_limit(est)),
        )(adj.astype(jnp.bfloat16), wh)

    # Drop the lane padding that was only there for lane-dense stores / MXU fill.
    return out_p[:, :f_out]


# ----------------------------------------------------------------------------
# Deterministic parameter init (matches nn.init.xavier_uniform_ with gain=1.414)
# ----------------------------------------------------------------------------
def xavier_uniform(key, shape, gain=1.414):
    fan_in, fan_out = shape[0], shape[1]
    bound = gain * (6.0 / (fan_in + fan_out)) ** 0.5
    return jax.random.uniform(key, shape, jnp.float32, -bound, bound)


if __name__ == "__main__":
    key = jax.random.PRNGKey(0)
    k_h, k_adj, k_w, k_a = jax.random.split(key, 4)

    N = 256          # number of graph nodes (gives a 2-step row-tile grid)
    in_features = 64
    out_features = 32
    alpha = 0.2      # LeakyReLU negative slope

    h = jax.random.normal(k_h, (N, in_features), jnp.float32)
    # binary-ish adjacency with self-loops
    adj = (jax.random.uniform(k_adj, (N, N)) > 0.7).astype(jnp.float32)
    adj = jnp.maximum(adj, jnp.eye(N, dtype=jnp.float32))

    W = xavier_uniform(k_w, (in_features, out_features))
    a = xavier_uniform(k_a, (2 * out_features, 1))

    # do_att=True path (attention computed in-kernel) with concat=True (ELU)
    out_att = gat_forward(h, adj, W, a, alpha=alpha, concat=True, do_att=True)
    # do_att=False path (attention = adj)
    out_noatt = gat_forward(h, adj, W, a, alpha=alpha, concat=True, do_att=False)

    jax.block_until_ready(out_att)
    jax.block_until_ready(out_noatt)

    assert out_att.shape == (N, out_features)
    assert out_noatt.shape == (N, out_features)
    assert bool(jnp.isfinite(out_att).all())
    assert bool(jnp.isfinite(out_noatt).all())
    print("KERNEL_OK")
</pallas_src>

<mosaic_0001>
module attributes {stable_mosaic.version = 11 : i64} {
  func.func @_wh_att_kernel(%arg0: memref<256x128xbf16, #tpu.memory_space<vmem>>, %arg1: memref<128x128xbf16, #tpu.memory_space<vmem>>, %arg2: memref<128x2xf32, #tpu.memory_space<vmem>>, %arg3: memref<256x128xbf16, #tpu.memory_space<vmem>>, %arg4: memref<256x1xf32, #tpu.memory_space<vmem>>, %arg5: memref<1x256xf32, #tpu.memory_space<vmem>>) attributes {dimension_semantics = [], scalar_prefetch = 0 : i64, scratch_operands = 0 : i64, tpu.core_type = #tpu.core_type<tc>} {
    %c0 = arith.constant 0 : index
    %c0_0 = arith.constant 0 : index
    %0 = vector.load %arg0[%c0, %c0_0] : memref<256x128xbf16, #tpu.memory_space<vmem>>, vector<256x128xbf16>
    %c0_1 = arith.constant 0 : index
    %c0_2 = arith.constant 0 : index
    %1 = vector.load %arg1[%c0_1, %c0_2] : memref<128x128xbf16, #tpu.memory_space<vmem>>, vector<128x128xbf16>
    %cst = arith.constant dense<0.000000e+00> : vector<256x128xf32>
    %2 = tpu.matmul %0, %1, %cst {dimension_numbers = #tpu.dot_dimension_numbers<[1], [0], [0], [1], [0, 0, 1, 1], [], []>} : vector<256x128xbf16>, vector<128x128xbf16>, vector<256x128xf32> -> vector<256x128xf32>
    %c0_3 = arith.constant 0 : index
    %c0_4 = arith.constant 0 : index
    %3 = vector.load %arg2[%c0_3, %c0_4] : memref<128x2xf32, #tpu.memory_space<vmem>>, vector<128x2xf32>
    %cst_5 = arith.constant dense<0.000000e+00> : vector<256x2xf32>
    %4 = tpu.matmul %2, %3, %cst_5 {dimension_numbers = #tpu.dot_dimension_numbers<[1], [0], [0], [1], [0, 0, 1, 1], [], []>} : vector<256x128xf32>, vector<128x2xf32>, vector<256x2xf32> -> vector<256x2xf32>
    %5 = arith.truncf %2 : vector<256x128xf32> to vector<256x128xbf16>
    %c0_6 = arith.constant 0 : index
    %c0_7 = arith.constant 0 : index
    %6 = vector.load %arg3[%c0_6, %c0_7] : memref<256x128xbf16, #tpu.memory_space<vmem>>, vector<256x128xbf16>
    tpu.vector_store %arg3[%c0_6, %c0_7], %5 {strides = array<i32>} : memref<256x128xbf16, #tpu.memory_space<vmem>>, vector<256x128xbf16>,
    %7 = vector.extract_strided_slice %4 {offsets = [0, 0], sizes = [256, 1], strides = [1, 1]} : vector<256x2xf32> to vector<256x1xf32>
    %c0_8 = arith.constant 0 : index
    %c0_9 = arith.constant 0 : index
    %8 = vector.load %arg4[%c0_8, %c0_9] : memref<256x1xf32, #tpu.memory_space<vmem>>, vector<256x1xf32>
    tpu.vector_store %arg4[%c0_8, %c0_9], %7 {strides = array<i32>} : memref<256x1xf32, #tpu.memory_space<vmem>>, vector<256x1xf32>,
    %9 = vector.extract_strided_slice %4 {offsets = [0, 1], sizes = [256, 1], strides = [1, 1]} : vector<256x2xf32> to vector<256x1xf32>
    %10 = tpu.transpose %9, [1, 0] : vector<256x1xf32> -> vector<1x256xf32>
    %c0_10 = arith.constant 0 : index
    %c0_11 = arith.constant 0 : index
    %11 = vector.load %arg5[%c0_10, %c0_11] : memref<1x256xf32, #tpu.memory_space<vmem>>, vector<1x256xf32>
    tpu.vector_store %arg5[%c0_10, %c0_11], %10 {strides = array<i32>} : memref<1x256xf32, #tpu.memory_space<vmem>>, vector<1x256xf32>,
    return
  }
}

</mosaic_0001>

<llo_original>
// kernel: tpu_custom_call.1
$region0: #{tpu_custom_call.1}
  #allocation0 [shape = 'u32[]', space=smem, size = 0x4, offset = 0x4, fixed_abs, tag = 'smem constant byte address 0x4 - core index']
  #allocation1 [shape = 'u32[144,128]{1,0:T(1,128)}', space=vmem, size = 0x12000, scoped, tag = 'internal scratch']
  %s0 = inlined_call_operand.vmem [shape: bf16[256,128], index: 0, kind: input, shape index: {}]
  %s1 = inlined_call_operand.hbm [shape: bf16[128,128], index: 1, kind: input, shape index: {}]
  %s2 = inlined_call_operand.vmem [shape: f32[128,2], index: 2, kind: input, shape index: {}]
  %s3 = inlined_call_operand.hbm [shape: bf16[256,128], index: 3, kind: output, shape index: {0}]
  %s4 = inlined_call_operand.vmem [shape: f32[256,1], index: 4, kind: output, shape index: {1}]
  %s5 = inlined_call_operand.hbm [shape: f32[1,256], index: 5, kind: output, shape index: {2}]
  %6 = xla_tuple %s3, %s4, %s5
  %s7 = sld [smem:[#allocation0]]
  $region42: #{tpu_custom_call.1} parent=0
    _
  %s9 = ssub.s32 1, %s7
  %s10 = scalar_select 0, %s9, %s7
  $region1: #{tpu_custom_call.1} parent=0
    #allocation2 [shape = 'u8[32768]{0}', space=vmem, size = 0x8000, scoped, tag = 'input window, operand 1, single buffered']
    #allocation3 [shape = 's32[1]{0}', space=sflag, size = 0x4, scoped, tag = 'scoped memory for tpu_custom_call.1']
    #allocation4 [shape = 's32[1]{0}', space=sflag, size = 0x4, scoped, tag = 'scoped memory for tpu_custom_call.1']
    #allocation5 [shape = 'u8[65536]{0}', space=vmem, size = 0x10000, scoped, tag = 'output window, operand 0, single buffered']
    #allocation6 [shape = 'u8[1024]{0}', space=vmem, size = 0x400, scoped, tag = 'output window, operand 2, single buffered']
    #allocation7 [shape = 's32[1]{0}', space=sflag, size = 0x4, scoped, tag = 'scoped memory for tpu_custom_call.1']
    %11 = vsyncpa [#allocation3], 0
    %12 = vsyncpa [#allocation4], 0
    %13 = vsyncpa [#allocation7], 0
    // Predicated region
    $region2: #{tpu_custom_call.1} parent=1 // pred_check
      _
    $region3: #{tpu_custom_call.1} parent=1 // pred_check_branch
      %15 = sbr.rel (0) target = $region5
    $region4: #{tpu_custom_call.1} parent=1 // pred_region
      _
    $region5: #{tpu_custom_call.1} parent=1 // pred_fallthru
      _
    // Predicated region
    $region6: #{tpu_custom_call.1} parent=1 // pred_check
      _
    $region7: #{tpu_custom_call.1} parent=1 // pred_check_branch
      %17 = sbr.rel (0) target = $region9
    $region8: #{tpu_custom_call.1} parent=1 // pred_region
      %s19 = ssub.s32 1024, 1024
      %20 = vsyncadd [#allocation3], %s19
      %s21 = sshll.u32 [#allocation2], 4
      %s22 = int_to_ptr.vmem [resolvable:$true] %s21
      %27 = dma.hbm_to_vmem [thread:$0]  %s1, 1024, %s22, [#allocation3], 64, 64, 4
    $region9: #{tpu_custom_call.1} parent=1 // pred_fallthru
      _
    // Predicated region
    $region10: #{tpu_custom_call.1} parent=1 // pred_check
      _
    $region11: #{tpu_custom_call.1} parent=1 // pred_check_branch
      %29 = sbr.rel (0) target = $region13
    $region12: #{tpu_custom_call.1} parent=1 // pred_region
      _
    $region13: #{tpu_custom_call.1} parent=1 // pred_fallthru
      _
    // Predicated region
    $region14: #{tpu_custom_call.1} parent=1 // pred_check
      _
    $region15: #{tpu_custom_call.1} parent=1 // pred_check_branch
      %31 = sbr.rel (0) target = $region17
    $region16: #{tpu_custom_call.1} parent=1 // pred_region
      %32 = dma.done [#allocation3], 1024
    $region17: #{tpu_custom_call.1} parent=1 // pred_fallthru
      _
    %v34 = vld [vmem:[%s0] sm:$0xf]
    %v35 = vld [vmem:[%s0 + $0x4] sm:$0xf]
    %v36 = vld [vmem:[%s0 + $0x8] sm:$0xf]
    %v37 = vld [vmem:[%s0 + $0xc] sm:$0xf]
    %v38 = vld [vmem:[%s0 + $0x10] sm:$0xf]
    %v39 = vld [vmem:[%s0 + $0x14] sm:$0xf]
    %v40 = vld [vmem:[%s0 + $0x18] sm:$0xf]
    %v41 = vld [vmem:[%s0 + $0x1c] sm:$0xf]
    %v42 = vld [vmem:[%s0 + $0x20] sm:$0xf]
    %v43 = vld [vmem:[%s0 + $0x24] sm:$0xf]
    %v44 = vld [vmem:[%s0 + $0x28] sm:$0xf]
    %v45 = vld [vmem:[%s0 + $0x2c] sm:$0xf]
    %v46 = vld [vmem:[%s0 + $0x30] sm:$0xf]
    %v47 = vld [vmem:[%s0 + $0x34] sm:$0xf]
    %v48 = vld [vmem:[%s0 + $0x38] sm:$0xf]
    %v49 = vld [vmem:[%s0 + $0x3c] sm:$0xf]
    %v50 = vld [vmem:[%s0 + $0x40] sm:$0xf]
    %v51 = vld [vmem:[%s0 + $0x44] sm:$0xf]
    %v52 = vld [vmem:[%s0 + $0x48] sm:$0xf]
    %v53 = vld [vmem:[%s0 + $0x4c] sm:$0xf]
    %v54 = vld [vmem:[%s0 + $0x50] sm:$0xf]
    %v55 = vld [vmem:[%s0 + $0x54] sm:$0xf]
    %v56 = vld [vmem:[%s0 + $0x58] sm:$0xf]
    %v57 = vld [vmem:[%s0 + $0x5c] sm:$0xf]
    %v58 = vld [vmem:[%s0 + $0x60] sm:$0xf]
    %v59 = vld [vmem:[%s0 + $0x64] sm:$0xf]
    %v60 = vld [vmem:[%s0 + $0x68] sm:$0xf]
    %v61 = vld [vmem:[%s0 + $0x6c] sm:$0xf]
    %v62 = vld [vmem:[%s0 + $0x70] sm:$0xf]
    %v63 = vld [vmem:[%s0 + $0x74] sm:$0xf]
    %v64 = vld [vmem:[%s0 + $0x78] sm:$0xf]
    %v65 = vld [vmem:[%s0 + $0x7c] sm:$0xf]
    %v66 = vld [vmem:[#allocation2] sm:$0xf]
    %v67 = vld [vmem:[#allocation2 + $0x4] sm:$0xf]
    %v68 = vld [vmem:[#allocation2 + $0x8] sm:$0xf]
    %v69 = vld [vmem:[#allocation2 + $0xc] sm:$0xf]
    %v70 = vld [vmem:[#allocation2 + $0x10] sm:$0xf]
    %v71 = vld [vmem:[#allocation2 + $0x14] sm:$0xf]
    %v72 = vld [vmem:[#allocation2 + $0x18] sm:$0xf]
    %v73 = vld [vmem:[#allocation2 + $0x1c] sm:$0xf]
    %v74 = vld [vmem:[#allocation2 + $0x20] sm:$0xf]
    %v75 = vld [vmem:[#allocation2 + $0x24] sm:$0xf]
    %v76 = vld [vmem:[#allocation2 + $0x28] sm:$0xf]
    %v77 = vld [vmem:[#allocation2 + $0x2c] sm:$0xf]
    %v78 = vld [vmem:[#allocation2 + $0x30] sm:$0xf]
    %v79 = vld [vmem:[#allocation2 + $0x34] sm:$0xf]
    %v80 = vld [vmem:[#allocation2 + $0x38] sm:$0xf]
    %v81 = vld [vmem:[#allocation2 + $0x3c] sm:$0xf]
    %v114 = vunpack.c.l.b16 %v34
    %v115 = vunpack.c.l.b16 %v35
    %v116 = vunpack.c.l.b16 %v36
    %v117 = vunpack.c.l.b16 %v37
    %v118 = vunpack.c.l.b16 %v38
    %v119 = vunpack.c.l.b16 %v39
    %v120 = vunpack.c.l.b16 %v40
    %v121 = vunpack.c.l.b16 %v41
    %v122 = vunpack.c.l.b16 %v42
    %v123 = vunpack.c.l.b16 %v43
    %v124 = vunpack.c.l.b16 %v44
    %v125 = vunpack.c.l.b16 %v45
    %v126 = vunpack.c.l.b16 %v46
    %v127 = vunpack.c.l.b16 %v47
    %v128 = vunpack.c.l.b16 %v48
    %v129 = vunpack.c.l.b16 %v49
    %v130 = vunpack.c.l.b16 %v50
    %v131 = vunpack.c.l.b16 %v51
    %v132 = vunpack.c.l.b16 %v52
    %v133 = vunpack.c.l.b16 %v53
    %v134 = vunpack.c.l.b16 %v54
    %v135 = vunpack.c.l.b16 %v55
    %v136 = vunpack.c.l.b16 %v56
    %v137 = vunpack.c.l.b16 %v57
    %v138 = vunpack.c.l.b16 %v58
    %v139 = vunpack.c.l.b16 %v59
    %v140 = vunpack.c.l.b16 %v60
    %v141 = vunpack.c.l.b16 %v61
    %v142 = vunpack.c.l.b16 %v62
    %v143 = vunpack.c.l.b16 %v63
    %v144 = vunpack.c.l.b16 %v64
    %v145 = vunpack.c.l.b16 %v65
    %v146 = vpack.c.b16 %v115, %v114
    %v147 = vpack.c.b16 %v117, %v116
    %v148 = vpack.c.b16 %v119, %v118
    %v149 = vpack.c.b16 %v121, %v120
    %v150 = vpack.c.b16 %v123, %v122
    %v151 = vpack.c.b16 %v125, %v124
    %v152 = vpack.c.b16 %v127, %v126
    %v153 = vpack.c.b16 %v129, %v128
    %v154 = vpack.c.b16 %v131, %v130
    %v155 = vpack.c.b16 %v133, %v132
    %v156 = vpack.c.b16 %v135, %v134
    %v157 = vpack.c.b16 %v137, %v136
    %v158 = vpack.c.b16 %v139, %v138
    %v159 = vpack.c.b16 %v141, %v140
    %v160 = vpack.c.b16 %v143, %v142
    %v161 = vpack.c.b16 %v145, %v144
    %v194 = vunpack.c.l.b16 %v66
    %v195 = vunpack.c.l.b16 %v67
    %v196 = vunpack.c.l.b16 %v68
    %v197 = vunpack.c.l.b16 %v69
    %v198 = vunpack.c.l.b16 %v70
    %v199 = vunpack.c.l.b16 %v71
    %v200 = vunpack.c.l.b16 %v72
    %v201 = vunpack.c.l.b16 %v73
    %v202 = vunpack.c.l.b16 %v74
    %v203 = vunpack.c.l.b16 %v75
    %v204 = vunpack.c.l.b16 %v76
    %v205 = vunpack.c.l.b16 %v77
    %v206 = vunpack.c.l.b16 %v78
    %v207 = vunpack.c.l.b16 %v79
    %v208 = vunpack.c.l.b16 %v80
    %v209 = vunpack.c.l.b16 %v81
    %v210 = vpack.c.b16 %v195, %v194
    %v211 = vpack.c.b16 %v197, %v196
    %v212 = vpack.c.b16 %v199, %v198
    %v213 = vpack.c.b16 %v201, %v200
    %v214 = vpack.c.b16 %v203, %v202
    %v215 = vpack.c.b16 %v205, %v204
    %v216 = vpack.c.b16 %v207, %v206
    %v217 = vpack.c.b16 %v209, %v208
    %226 = vmatprep.subr.bf16.mxu0 0
    %227 = vmatpush1.bf16.msra.mxu0 %v217
    %228 = vmatprep.subr.bf16.mxu0 0
    %229 = vmatpush1.bf16.msra.mxu0 %v216
    %230 = vmatprep.subr.bf16.mxu0 0
    %231 = vmatpush1.bf16.msra.mxu0 %v215
    %232 = vmatprep.subr.bf16.mxu0 0
    %233 = vmatpush1.bf16.msra.mxu0 %v214
    %234 = vmatprep.subr.bf16.mxu0 0
    %235 = vmatpush1.bf16.msra.mxu0 %v213
    %236 = vmatprep.subr.bf16.mxu0 0
    %237 = vmatpush1.bf16.msra.mxu0 %v212
    %238 = vmatprep.subr.bf16.mxu0 0
    %239 = vmatpush1.bf16.msra.mxu0 %v211
    %240 = vmatprep.subr.bf16.mxu0 0
    %241 = vmatpush1.bf16.msra.mxu0 %v210
    %242 = vmatprep.subr.bf16.mxu0 0
    %243 = vmatpush2.bf16.msra.mxu0 0
    %244 = vmatprep.subr.bf16.mxu0 0
    %245 = vmatpush2.bf16.msra.mxu0 0
    %246 = vmatprep.subr.bf16.mxu0 0
    %247 = vmatpush2.bf16.msra.mxu0 0
    %248 = vmatprep.subr.bf16.mxu0 0
    %249 = vmatpush2.bf16.msra.mxu0 0
    %250 = vmatprep.subr.bf16.mxu0 0
    %251 = vmatpush2.bf16.msra.mxu0 0
    %252 = vmatprep.subr.bf16.mxu0 0
    %253 = vmatpush2.bf16.msra.mxu0 0
    %254 = vmatprep.subr.bf16.mxu0 0
    %255 = vmatpush2.bf16.msra.mxu0 0
    %256 = vmatprep.subr.bf16.mxu0 0
    %257 = vmatpush2.bf16.msra.mxu0 0
    %258 = vmatprep.mubr.bf16.mxu0 0
    %259 = vmatmul.mubr.bf16.gmra.mxu0 %v146
    %v260 = vpop.f32.mrf.mxu0
    %v261 = vadd.f32 0.0, %v260
    %v262 = vpop.f32.mrf.mxu0
    %v263 = vpop.f32.mrf.mxu0
    %v264 = vadd.f32 0.0, %v263
    %v265 = vpop.f32.mrf.mxu0
    %266 = vmatprep.mubr.bf16.mxu0 0
    %267 = vmatmul.mubr.bf16.gmra.mxu0 %v147
    %v268 = vpop.f32.mrf.mxu0
    %v269 = vadd.f32 0.0, %v268
    %v270 = vpop.f32.mrf.mxu0
    %v271 = vpop.f32.mrf.mxu0
    %v272 = vadd.f32 0.0, %v271
    %v273 = vpop.f32.mrf.mxu0
    %274 = vmatprep.mubr.bf16.mxu0 0
    %275 = vmatmul.mubr.bf16.gmra.mxu0 %v148
    %v276 = vpop.f32.mrf.mxu0
    %v277 = vadd.f32 0.0, %v276
    %v278 = vpop.f32.mrf.mxu0
    %v279 = vpop.f32.mrf.mxu0
    %v280 = vadd.f32 0.0, %v279
    %v281 = vpop.f32.mrf.mxu0
    %282 = vmatprep.mubr.bf16.mxu0 0
    %283 = vmatmul.mubr.bf16.gmra.mxu0 %v149
    %v284 = vpop.f32.mrf.mxu0
    %v285 = vadd.f32 0.0, %v284
    %v286 = vpop.f32.mrf.mxu0
    %v287 = vpop.f32.mrf.mxu0
    %v288 = vadd.f32 0.0, %v287
    %v289 = vpop.f32.mrf.mxu0
    %290 = vmatprep.mubr.bf16.mxu0 0
    %291 = vmatmul.mubr.bf16.gmra.mxu0 %v150
    %v292 = vpop.f32.mrf.mxu0
    %v293 = vadd.f32 0.0, %v292
    %v294 = vpop.f32.mrf.mxu0
    %v295 = vpop.f32.mrf.mxu0
    %v296 = vadd.f32 0.0, %v295
    %v297 = vpop.f32.mrf.mxu0
    %298 = vmatprep.mubr.bf16.mxu0 0
    %299 = vmatmul.mubr.bf16.gmra.mxu0 %v151
    %v300 = vpop.f32.mrf.mxu0
    %v301 = vadd.f32 0.0, %v300
    %v302 = vpop.f32.mrf.mxu0
    %v303 = vpop.f32.mrf.mxu0
    %v304 = vadd.f32 0.0, %v303
    %v305 = vpop.f32.mrf.mxu0
    %306 = vmatprep.mubr.bf16.mxu0 0
    %307 = vmatmul.mubr.bf16.gmra.mxu0 %v152
    %v308 = vpop.f32.mrf.mxu0
    %v309 = vadd.f32 0.0, %v308
    %v310 = vpop.f32.mrf.mxu0
    %v311 = vpop.f32.mrf.mxu0
    %v312 = vadd.f32 0.0, %v311
    %v313 = vpop.f32.mrf.mxu0
    %314 = vmatprep.mubr.bf16.mxu0 0
    %315 = vmatmul.mubr.bf16.gmra.mxu0 %v153
    %v316 = vpop.f32.mrf.mxu0
    %v317 = vadd.f32 0.0, %v316
    %v318 = vpop.f32.mrf.mxu0
    %v319 = vpop.f32.mrf.mxu0
    %v320 = vadd.f32 0.0, %v319
    %v321 = vpop.f32.mrf.mxu0
    %322 = vmatprep.mubr.bf16.mxu0 0
    %323 = vmatmul.mubr.bf16.gmra.mxu0 %v154
    %v324 = vpop.f32.mrf.mxu0
    %v325 = vadd.f32 0.0, %v324
    %v326 = vpop.f32.mrf.mxu0
    %v327 = vpop.f32.mrf.mxu0
    %v328 = vadd.f32 0.0, %v327
    %v329 = vpop.f32.mrf.mxu0
    %330 = vmatprep.mubr.bf16.mxu0 0
    %331 = vmatmul.mubr.bf16.gmra.mxu0 %v155
    %v332 = vpop.f32.mrf.mxu0
    %v333 = vadd.f32 0.0, %v332
    %v334 = vpop.f32.mrf.mxu0
    %v335 = vpop.f32.mrf.mxu0
    %v336 = vadd.f32 0.0, %v335
    %v337 = vpop.f32.mrf.mxu0
    %338 = vmatprep.mubr.bf16.mxu0 0
    %339 = vmatmul.mubr.bf16.gmra.mxu0 %v156
    %v340 = vpop.f32.mrf.mxu0
    %v341 = vadd.f32 0.0, %v340
    %v342 = vpop.f32.mrf.mxu0
    %v343 = vpop.f32.mrf.mxu0
    %v344 = vadd.f32 0.0, %v343
    %v345 = vpop.f32.mrf.mxu0
    %346 = vmatprep.mubr.bf16.mxu0 0
    %347 = vmatmul.mubr.bf16.gmra.mxu0 %v157
    %v348 = vpop.f32.mrf.mxu0
    %v349 = vadd.f32 0.0, %v348
    %v350 = vpop.f32.mrf.mxu0
    %v351 = vpop.f32.mrf.mxu0
    %v352 = vadd.f32 0.0, %v351
    %v353 = vpop.f32.mrf.mxu0
    %354 = vmatprep.mubr.bf16.mxu0 0
    %355 = vmatmul.mubr.bf16.gmra.mxu0 %v158
    %v356 = vpop.f32.mrf.mxu0
    %v357 = vadd.f32 0.0, %v356
    %v358 = vpop.f32.mrf.mxu0
    %v359 = vpop.f32.mrf.mxu0
    %v360 = vadd.f32 0.0, %v359
    %v361 = vpop.f32.mrf.mxu0
    %362 = vmatprep.mubr.bf16.mxu0 0
    %363 = vmatmul.mubr.bf16.gmra.mxu0 %v159
    %v364 = vpop.f32.mrf.mxu0
    %v365 = vadd.f32 0.0, %v364
    %v366 = vpop.f32.mrf.mxu0
    %v367 = vpop.f32.mrf.mxu0
    %v368 = vadd.f32 0.0, %v367
    %v369 = vpop.f32.mrf.mxu0
    %370 = vmatprep.mubr.bf16.mxu0 0
    %371 = vmatmul.mubr.bf16.gmra.mxu0 %v160
    %v372 = vpop.f32.mrf.mxu0
    %v373 = vadd.f32 0.0, %v372
    %v374 = vpop.f32.mrf.mxu0
    %v375 = vpop.f32.mrf.mxu0
    %v376 = vadd.f32 0.0, %v375
    %v377 = vpop.f32.mrf.mxu0
    %378 = vmatprep.mubr.bf16.mxu0 0
    %379 = vmatmul.mubr.bf16.gmra.mxu0 %v161
    %v380 = vpop.f32.mrf.mxu0
    %v381 = vadd.f32 0.0, %v380
    %v382 = vpop.f32.mrf.mxu0
    %v383 = vpop.f32.mrf.mxu0
    %v384 = vadd.f32 0.0, %v383
    %v385 = vpop.f32.mrf.mxu0
    %386 = vdwg.mxu0
    %v387 = vld [vmem:[%s2] sm:$0xff]
    %v388 = vld [vmem:[%s2 + $0x8] sm:$0xff]
    %v389 = vld [vmem:[%s2 + $0x10] sm:$0xff]
    %v390 = vld [vmem:[%s2 + $0x18] sm:$0xff]
    %v391 = vld [vmem:[%s2 + $0x20] sm:$0xff]
    %v392 = vld [vmem:[%s2 + $0x28] sm:$0xff]
    %v393 = vld [vmem:[%s2 + $0x30] sm:$0xff]
    %v394 = vld [vmem:[%s2 + $0x38] sm:$0xff]
    %v395 = vld [vmem:[%s2 + $0x40] sm:$0xff]
    %v396 = vld [vmem:[%s2 + $0x48] sm:$0xff]
    %v397 = vld [vmem:[%s2 + $0x50] sm:$0xff]
    %v398 = vld [vmem:[%s2 + $0x58] sm:$0xff]
    %v399 = vld [vmem:[%s2 + $0x60] sm:$0xff]
    %v400 = vld [vmem:[%s2 + $0x68] sm:$0xff]
    %v401 = vld [vmem:[%s2 + $0x70] sm:$0xff]
    %v402 = vld [vmem:[%s2 + $0x78] sm:$0xff]
    %403 = vmatprep.subr.mxu0 0.0
    %404 = vmatpush1.msra.mxu0 %v402
    %405 = vmatprep.subr.mxu0 0.0
    %406 = vmatpush1.msra.mxu0 %v401
    %407 = vmatprep.subr.mxu0 0.0
    %408 = vmatpush1.msra.mxu0 %v400
    %409 = vmatprep.subr.mxu0 0.0
    %410 = vmatpush1.msra.mxu0 %v399
    %411 = vmatprep.subr.mxu0 0.0
    %412 = vmatpush1.msra.mxu0 %v398
    %413 = vmatprep.subr.mxu0 0.0
    %414 = vmatpush1.msra.mxu0 %v397
    %415 = vmatprep.subr.mxu0 0.0
    %416 = vmatpush1.msra.mxu0 %v396
    %417 = vmatprep.subr.mxu0 0.0
    %418 = vmatpush1.msra.mxu0 %v395
    %419 = vmatprep.subr.mxu0 0.0
    %420 = vmatpush1.msra.mxu0 %v394
    %421 = vmatprep.subr.mxu0 0.0
    %422 = vmatpush1.msra.mxu0 %v393
    %423 = vmatprep.subr.mxu0 0.0
    %424 = vmatpush1.msra.mxu0 %v392
    %425 = vmatprep.subr.mxu0 0.0
    %426 = vmatpush1.msra.mxu0 %v391
    %427 = vmatprep.subr.mxu0 0.0
    %428 = vmatpush1.msra.mxu0 %v390
    %429 = vmatprep.subr.mxu0 0.0
    %430 = vmatpush1.msra.mxu0 %v389
    %431 = vmatprep.subr.mxu0 0.0
    %432 = vmatpush1.msra.mxu0 %v388
    %433 = vmatprep.subr.mxu0 0.0
    %434 = vmatpush1.msra.mxu0 %v387
    %435 = vmatprep.subr.mxu0 0.0
    %436 = vmatpush2.msra.mxu0 0.0
    %437 = vmatprep.subr.mxu0 0.0
    %438 = vmatpush2.msra.mxu0 0.0
    %439 = vmatprep.subr.mxu0 0.0
    %440 = vmatpush2.msra.mxu0 0.0
    %441 = vmatprep.subr.mxu0 0.0
    %442 = vmatpush2.msra.mxu0 0.0
    %443 = vmatprep.subr.mxu0 0.0
    %444 = vmatpush2.msra.mxu0 0.0
    %445 = vmatprep.subr.mxu0 0.0
    %446 = vmatpush2.msra.mxu0 0.0
    %447 = vmatprep.subr.mxu0 0.0
    %448 = vmatpush2.msra.mxu0 0.0
    %449 = vmatprep.subr.mxu0 0.0
    %450 = vmatpush2.msra.mxu0 0.0
    %451 = vmatprep.subr.mxu0 0.0
    %452 = vmatpush2.msra.mxu0 0.0
    %453 = vmatprep.subr.mxu0 0.0
    %454 = vmatpush2.msra.mxu0 0.0
    %455 = vmatprep.subr.mxu0 0.0
    %456 = vmatpush2.msra.mxu0 0.0
    %457 = vmatprep.subr.mxu0 0.0
    %458 = vmatpush2.msra.mxu0 0.0
    %459 = vmatprep.subr.mxu0 0.0
    %460 = vmatpush2.msra.mxu0 0.0
    %461 = vmatprep.subr.mxu0 0.0
    %462 = vmatpush2.msra.mxu0 0.0
    %463 = vmatprep.subr.mxu0 0.0
    %464 = vmatpush2.msra.mxu0 0.0
    %465 = vmatprep.subr.mxu0 0.0
    %466 = vmatpush2.msra.mxu0 0.0
    %467 = vmatprep.mubr.f32.mxu0 0.0
    %468 = vmatmul.mubr.f32.gmra.mxu0 %v261
    %v469 = vpop.f32.mrf.mxu0
    %v470 = vadd.f32 0.0, %v469
    %v471 = vpop.f32.mrf.mxu0
    %472 = vmatprep.mubr.f32.mxu0 0.0
    %473 = vmatmul.mubr.f32.gmra.mxu0 %v264
    %v474 = vpop.f32.mrf.mxu0
    %v475 = vadd.f32 0.0, %v474
    %v476 = vpop.f32.mrf.mxu0
    %477 = vmatprep.mubr.f32.mxu0 0.0
    %478 = vmatmul.mubr.f32.gmra.mxu0 %v269
    %v479 = vpop.f32.mrf.mxu0
    %v480 = vadd.f32 0.0, %v479
    %v481 = vpop.f32.mrf.mxu0
    %482 = vmatprep.mubr.f32.mxu0 0.0
    %483 = vmatmul.mubr.f32.gmra.mxu0 %v272
    %v484 = vpop.f32.mrf.mxu0
    %v485 = vadd.f32 0.0, %v484
    %v486 = vpop.f32.mrf.mxu0
    %487 = vmatprep.mubr.f32.mxu0 0.0
    %488 = vmatmul.mubr.f32.gmra.mxu0 %v277
    %v489 = vpop.f32.mrf.mxu0
    %v490 = vadd.f32 0.0, %v489
    %v491 = vpop.f32.mrf.mxu0
    %492 = vmatprep.mubr.f32.mxu0 0.0
    %493 = vmatmul.mubr.f32.gmra.mxu0 %v280
    %v494 = vpop.f32.mrf.mxu0
    %v495 = vadd.f32 0.0, %v494
    %v496 = vpop.f32.mrf.mxu0
    %497 = vmatprep.mubr.f32.mxu0 0.0
    %498 = vmatmul.mubr.f32.gmra.mxu0 %v285
    %v499 = vpop.f32.mrf.mxu0
    %v500 = vadd.f32 0.0, %v499
    %v501 = vpop.f32.mrf.mxu0
    %502 = vmatprep.mubr.f32.mxu0 0.0
    %503 = vmatmul.mubr.f32.gmra.mxu0 %v288
    %v504 = vpop.f32.mrf.mxu0
    %v505 = vadd.f32 0.0, %v504
    %v506 = vpop.f32.mrf.mxu0
    %507 = vmatprep.mubr.f32.mxu0 0.0
    %508 = vmatmul.mubr.f32.gmra.mxu0 %v293
    %v509 = vpop.f32.mrf.mxu0
    %v510 = vadd.f32 0.0, %v509
    %v511 = vpop.f32.mrf.mxu0
    %512 = vmatprep.mubr.f32.mxu0 0.0
    %513 = vmatmul.mubr.f32.gmra.mxu0 %v296
    %v514 = vpop.f32.mrf.mxu0
    %v515 = vadd.f32 0.0, %v514
    %v516 = vpop.f32.mrf.mxu0
    %517 = vmatprep.mubr.f32.mxu0 0.0
    %518 = vmatmul.mubr.f32.gmra.mxu0 %v301
    %v519 = vpop.f32.mrf.mxu0
    %v520 = vadd.f32 0.0, %v519
    %v521 = vpop.f32.mrf.mxu0
    %522 = vmatprep.mubr.f32.mxu0 0.0
    %523 = vmatmul.mubr.f32.gmra.mxu0 %v304
    %v524 = vpop.f32.mrf.mxu0
    %v525 = vadd.f32 0.0, %v524
    %v526 = vpop.f32.mrf.mxu0
    %527 = vmatprep.mubr.f32.mxu0 0.0
    %528 = vmatmul.mubr.f32.gmra.mxu0 %v309
    %v529 = vpop.f32.mrf.mxu0
    %v530 = vadd.f32 0.0, %v529
    %v531 = vpop.f32.mrf.mxu0
    %532 = vmatprep.mubr.f32.mxu0 0.0
    %533 = vmatmul.mubr.f32.gmra.mxu0 %v312
    %v534 = vpop.f32.mrf.mxu0
    %v535 = vadd.f32 0.0, %v534
    %v536 = vpop.f32.mrf.mxu0
    %537 = vmatprep.mubr.f32.mxu0 0.0
    %538 = vmatmul.mubr.f32.gmra.mxu0 %v317
    %v539 = vpop.f32.mrf.mxu0
    %v540 = vadd.f32 0.0, %v539
    %v541 = vpop.f32.mrf.mxu0
    %542 = vmatprep.mubr.f32.mxu0 0.0
    %543 = vmatmul.mubr.f32.gmra.mxu0 %v320
    %v544 = vpop.f32.mrf.mxu0
    %v545 = vadd.f32 0.0, %v544
    %v546 = vpop.f32.mrf.mxu0
    %547 = vmatprep.mubr.f32.mxu0 0.0
    %548 = vmatmul.mubr.f32.gmra.mxu0 %v325
    %v549 = vpop.f32.mrf.mxu0
    %v550 = vadd.f32 0.0, %v549
    %v551 = vpop.f32.mrf.mxu0
    %552 = vmatprep.mubr.f32.mxu0 0.0
    %553 = vmatmul.mubr.f32.gmra.mxu0 %v328
    %v554 = vpop.f32.mrf.mxu0
    %v555 = vadd.f32 0.0, %v554
    %v556 = vpop.f32.mrf.mxu0
    %557 = vmatprep.mubr.f32.mxu0 0.0
    %558 = vmatmul.mubr.f32.gmra.mxu0 %v333
    %v559 = vpop.f32.mrf.mxu0
    %v560 = vadd.f32 0.0, %v559
    %v561 = vpop.f32.mrf.mxu0
    %562 = vmatprep.mubr.f32.mxu0 0.0
    %563 = vmatmul.mubr.f32.gmra.mxu0 %v336
    %v564 = vpop.f32.mrf.mxu0
    %v565 = vadd.f32 0.0, %v564
    %v566 = vpop.f32.mrf.mxu0
    %567 = vmatprep.mubr.f32.mxu0 0.0
    %568 = vmatmul.mubr.f32.gmra.mxu0 %v341
    %v569 = vpop.f32.mrf.mxu0
    %v570 = vadd.f32 0.0, %v569
    %v571 = vpop.f32.mrf.mxu0
    %572 = vmatprep.mubr.f32.mxu0 0.0
    %573 = vmatmul.mubr.f32.gmra.mxu0 %v344
    %v574 = vpop.f32.mrf.mxu0
    %v575 = vadd.f32 0.0, %v574
    %v576 = vpop.f32.mrf.mxu0
    %577 = vmatprep.mubr.f32.mxu0 0.0
    %578 = vmatmul.mubr.f32.gmra.mxu0 %v349
    %v579 = vpop.f32.mrf.mxu0
    %v580 = vadd.f32 0.0, %v579
    %v581 = vpop.f32.mrf.mxu0
    %582 = vmatprep.mubr.f32.mxu0 0.0
    %583 = vmatmul.mubr.f32.gmra.mxu0 %v352
    %v584 = vpop.f32.mrf.mxu0
    %v585 = vadd.f32 0.0, %v584
    %v586 = vpop.f32.mrf.mxu0
    %587 = vmatprep.mubr.f32.mxu0 0.0
    %588 = vmatmul.mubr.f32.gmra.mxu0 %v357
    %v589 = vpop.f32.mrf.mxu0
    %v590 = vadd.f32 0.0, %v589
    %v591 = vpop.f32.mrf.mxu0
    %592 = vmatprep.mubr.f32.mxu0 0.0
    %593 = vmatmul.mubr.f32.gmra.mxu0 %v360
    %v594 = vpop.f32.mrf.mxu0
    %v595 = vadd.f32 0.0, %v594
    %v596 = vpop.f32.mrf.mxu0
    %597 = vmatprep.mubr.f32.mxu0 0.0
    %598 = vmatmul.mubr.f32.gmra.mxu0 %v365
    %v599 = vpop.f32.mrf.mxu0
    %v600 = vadd.f32 0.0, %v599
    %v601 = vpop.f32.mrf.mxu0
    %602 = vmatprep.mubr.f32.mxu0 0.0
    %603 = vmatmul.mubr.f32.gmra.mxu0 %v368
    %v604 = vpop.f32.mrf.mxu0
    %v605 = vadd.f32 0.0, %v604
    %v606 = vpop.f32.mrf.mxu0
    %607 = vmatprep.mubr.f32.mxu0 0.0
    %608 = vmatmul.mubr.f32.gmra.mxu0 %v373
    %v609 = vpop.f32.mrf.mxu0
    %v610 = vadd.f32 0.0, %v609
    %v611 = vpop.f32.mrf.mxu0
    %612 = vmatprep.mubr.f32.mxu0 0.0
    %613 = vmatmul.mubr.f32.gmra.mxu0 %v376
    %v614 = vpop.f32.mrf.mxu0
    %v615 = vadd.f32 0.0, %v614
    %v616 = vpop.f32.mrf.mxu0
    %617 = vmatprep.mubr.f32.mxu0 0.0
    %618 = vmatmul.mubr.f32.gmra.mxu0 %v381
    %v619 = vpop.f32.mrf.mxu0
    %v620 = vadd.f32 0.0, %v619
    %v621 = vpop.f32.mrf.mxu0
    %622 = vmatprep.mubr.f32.mxu0 0.0
    %623 = vmatmul.mubr.f32.gmra.mxu0 %v384
    %v624 = vpop.f32.mrf.mxu0
    %v625 = vadd.f32 0.0, %v624
    %v626 = vpop.f32.mrf.mxu0
    %627 = vdwg.mxu0
    %v628 = vpack.c.bf16 %v264, %v261
    %v629 = vpack.c.bf16 %v272, %v269
    %v630 = vpack.c.bf16 %v280, %v277
    %v631 = vpack.c.bf16 %v288, %v285
    %v632 = vpack.c.bf16 %v296, %v293
    %v633 = vpack.c.bf16 %v304, %v301
    %v634 = vpack.c.bf16 %v312, %v309
    %v635 = vpack.c.bf16 %v320, %v317
    %v636 = vpack.c.bf16 %v328, %v325
    %v637 = vpack.c.bf16 %v336, %v333
    %v638 = vpack.c.bf16 %v344, %v341
    %v639 = vpack.c.bf16 %v352, %v349
    %v640 = vpack.c.bf16 %v360, %v357
    %v641 = vpack.c.bf16 %v368, %v365
    %v642 = vpack.c.bf16 %v376, %v373
    %v643 = vpack.c.bf16 %v384, %v381
    %v660 = vunpack.c.l.b16 %v628
    %v661 = vunpack.c.h.b16 %v628
    %v662 = vunpack.c.l.b16 %v629
    %v663 = vunpack.c.h.b16 %v629
    %v664 = vunpack.c.l.b16 %v630
    %v665 = vunpack.c.h.b16 %v630
    %v666 = vunpack.c.l.b16 %v631
    %v667 = vunpack.c.h.b16 %v631
    %v668 = vunpack.c.l.b16 %v632
    %v669 = vunpack.c.h.b16 %v632
    %v670 = vunpack.c.l.b16 %v633
    %v671 = vunpack.c.h.b16 %v633
    %v672 = vunpack.c.l.b16 %v634
    %v673 = vunpack.c.h.b16 %v634
    %v674 = vunpack.c.l.b16 %v635
    %v675 = vunpack.c.h.b16 %v635
    %v676 = vunpack.c.l.b16 %v636
    %v677 = vunpack.c.h.b16 %v636
    %v678 = vunpack.c.l.b16 %v637
    %v679 = vunpack.c.h.b16 %v637
    %v680 = vunpack.c.l.b16 %v638
    %v681 = vunpack.c.h.b16 %v638
    %v682 = vunpack.c.l.b16 %v639
    %v683 = vunpack.c.h.b16 %v639
    %v684 = vunpack.c.l.b16 %v640
    %v685 = vunpack.c.h.b16 %v640
    %v686 = vunpack.c.l.b16 %v641
    %v687 = vunpack.c.h.b16 %v641
    %v688 = vunpack.c.l.b16 %v642
    %v689 = vunpack.c.h.b16 %v642
    %v690 = vunpack.c.l.b16 %v643
    %v691 = vunpack.c.h.b16 %v643
    %v692 = vpack.c.b16 %v660, %v660
    %v693 = vpack.c.b16 %v661, %v661
    %v694 = vpack.c.b16 %v662, %v662
    %v695 = vpack.c.b16 %v663, %v663
    %v696 = vpack.c.b16 %v664, %v664
    %v697 = vpack.c.b16 %v665, %v665
    %v698 = vpack.c.b16 %v666, %v666
    %v699 = vpack.c.b16 %v667, %v667
    %v700 = vpack.c.b16 %v668, %v668
    %v701 = vpack.c.b16 %v669, %v669
    %v702 = vpack.c.b16 %v670, %v670
    %v703 = vpack.c.b16 %v671, %v671
    %v704 = vpack.c.b16 %v672, %v672
    %v705 = vpack.c.b16 %v673, %v673
    %v706 = vpack.c.b16 %v674, %v674
    %v707 = vpack.c.b16 %v675, %v675
    %v708 = vpack.c.b16 %v676, %v676
    %v709 = vpack.c.b16 %v677, %v677
    %v710 = vpack.c.b16 %v678, %v678
    %v711 = vpack.c.b16 %v679, %v679
    %v712 = vpack.c.b16 %v680, %v680
    %v713 = vpack.c.b16 %v681, %v681
    %v714 = vpack.c.b16 %v682, %v682
    %v715 = vpack.c.b16 %v683, %v683
    %v716 = vpack.c.b16 %v684, %v684
    %v717 = vpack.c.b16 %v685, %v685
    %v718 = vpack.c.b16 %v686, %v686
    %v719 = vpack.c.b16 %v687, %v687
    %v720 = vpack.c.b16 %v688, %v688
    %v721 = vpack.c.b16 %v689, %v689
    %v722 = vpack.c.b16 %v690, %v690
    %v723 = vpack.c.b16 %v691, %v691
    %756 = vst [vmem:[#allocation5] sm:$0xf] %v692
    %757 = vst [vmem:[#allocation5 + $0x4] sm:$0xf] %v693
    %758 = vst [vmem:[#allocation5 + $0x8] sm:$0xf] %v694
    %759 = vst [vmem:[#allocation5 + $0xc] sm:$0xf] %v695
    %760 = vst [vmem:[#allocation5 + $0x10] sm:$0xf] %v696
    %761 = vst [vmem:[#allocation5 + $0x14] sm:$0xf] %v697
    %762 = vst [vmem:[#allocation5 + $0x18] sm:$0xf] %v698
    %763 = vst [vmem:[#allocation5 + $0x1c] sm:$0xf] %v699
    %764 = vst [vmem:[#allocation5 + $0x20] sm:$0xf] %v700
    %765 = vst [vmem:[#allocation5 + $0x24] sm:$0xf] %v701
    %766 = vst [vmem:[#allocation5 + $0x28] sm:$0xf] %v702
    %767 = vst [vmem:[#allocation5 + $0x2c] sm:$0xf] %v703
    %768 = vst [vmem:[#allocation5 + $0x30] sm:$0xf] %v704
    %769 = vst [vmem:[#allocation5 + $0x34] sm:$0xf] %v705
    %770 = vst [vmem:[#allocation5 + $0x38] sm:$0xf] %v706
    %771 = vst [vmem:[#allocation5 + $0x3c] sm:$0xf] %v707
    %772 = vst [vmem:[#allocation5 + $0x40] sm:$0xf] %v708
    %773 = vst [vmem:[#allocation5 + $0x44] sm:$0xf] %v709
    %774 = vst [vmem:[#allocation5 + $0x48] sm:$0xf] %v710
    %775 = vst [vmem:[#allocation5 + $0x4c] sm:$0xf] %v711
    %776 = vst [vmem:[#allocation5 + $0x50] sm:$0xf] %v712
    %777 = vst [vmem:[#allocation5 + $0x54] sm:$0xf] %v713
    %778 = vst [vmem:[#allocation5 + $0x58] sm:$0xf] %v714
    %779 = vst [vmem:[#allocation5 + $0x5c] sm:$0xf] %v715
    %780 = vst [vmem:[#allocation5 + $0x60] sm:$0xf] %v716
    %781 = vst [vmem:[#allocation5 + $0x64] sm:$0xf] %v717
    %782 = vst [vmem:[#allocation5 + $0x68] sm:$0xf] %v718
    %783 = vst [vmem:[#allocation5 + $0x6c] sm:$0xf] %v719
    %784 = vst [vmem:[#allocation5 + $0x70] sm:$0xf] %v720
    %785 = vst [vmem:[#allocation5 + $0x74] sm:$0xf] %v721
    %786 = vst [vmem:[#allocation5 + $0x78] sm:$0xf] %v722
    %787 = vst [vmem:[#allocation5 + $0x7c] sm:$0xf] %v723
    %vm788 = vcmask 7168
    %789 = vst.msk [vmem:[%s4] sm:$0xff] %vm788, %v470
    %790 = vst.msk [vmem:[%s4 + $0x8] sm:$0xff] %vm788, %v475
    %791 = vst.msk [vmem:[%s4 + $0x10] sm:$0xff] %vm788, %v480
    %792 = vst.msk [vmem:[%s4 + $0x18] sm:$0xff] %vm788, %v485
    %793 = vst.msk [vmem:[%s4 + $0x20] sm:$0xff] %vm788, %v490
    %794 = vst.msk [vmem:[%s4 + $0x28] sm:$0xff] %vm788, %v495
    %795 = vst.msk [vmem:[%s4 + $0x30] sm:$0xff] %vm788, %v500
    %796 = vst.msk [vmem:[%s4 + $0x38] sm:$0xff] %vm788, %v505
    %797 = vst.msk [vmem:[%s4 + $0x40] sm:$0xff] %vm788, %v510
    %798 = vst.msk [vmem:[%s4 + $0x48] sm:$0xff] %vm788, %v515
    %799 = vst.msk [vmem:[%s4 + $0x50] sm:$0xff] %vm788, %v520
    %800 = vst.msk [vmem:[%s4 + $0x58] sm:$0xff] %vm788, %v525
    %801 = vst.msk [vmem:[%s4 + $0x60] sm:$0xff] %vm788, %v530
    %802 = vst.msk [vmem:[%s4 + $0x68] sm:$0xff] %vm788, %v535
    %803 = vst.msk [vmem:[%s4 + $0x70] sm:$0xff] %vm788, %v540
    %804 = vst.msk [vmem:[%s4 + $0x78] sm:$0xff] %vm788, %v545
    %805 = vst.msk [vmem:[%s4 + $0x80] sm:$0xff] %vm788, %v550
    %806 = vst.msk [vmem:[%s4 + $0x88] sm:$0xff] %vm788, %v555
    %807 = vst.msk [vmem:[%s4 + $0x90] sm:$0xff] %vm788, %v560
    %808 = vst.msk [vmem:[%s4 + $0x98] sm:$0xff] %vm788, %v565
    %809 = vst.msk [vmem:[%s4 + $0xa0] sm:$0xff] %vm788, %v570
    %810 = vst.msk [vmem:[%s4 + $0xa8] sm:$0xff] %vm788, %v575
    %811 = vst.msk [vmem:[%s4 + $0xb0] sm:$0xff] %vm788, %v580
    %812 = vst.msk [vmem:[%s4 + $0xb8] sm:$0xff] %vm788, %v585
    %813 = vst.msk [vmem:[%s4 + $0xc0] sm:$0xff] %vm788, %v590
    %814 = vst.msk [vmem:[%s4 + $0xc8] sm:$0xff] %vm788, %v595
    %815 = vst.msk [vmem:[%s4 + $0xd0] sm:$0xff] %vm788, %v600
    %816 = vst.msk [vmem:[%s4 + $0xd8] sm:$0xff] %vm788, %v605
    %817 = vst.msk [vmem:[%s4 + $0xe0] sm:$0xff] %vm788, %v610
    %818 = vst.msk [vmem:[%s4 + $0xe8] sm:$0xff] %vm788, %v615
    %819 = vst.msk [vmem:[%s4 + $0xf0] sm:$0xff] %vm788, %v620
    %820 = vst.msk [vmem:[%s4 + $0xf8] sm:$0xff] %vm788, %v625
    %853 = vrot.lane.b32.xlu0 %v470, 127
    %v854 = vpop.permute.xlu0 %853
    %855 = vrot.lane.b32.xlu0 %v475, 127
    %v856 = vpop.permute.xlu0 %855
    %857 = vrot.lane.b32.xlu0 %v480, 127
    %v858 = vpop.permute.xlu0 %857
    %859 = vrot.lane.b32.xlu0 %v485, 127
    %v860 = vpop.permute.xlu0 %859
    %861 = vrot.lane.b32.xlu0 %v490, 127
    %v862 = vpop.permute.xlu0 %861
    %863 = vrot.lane.b32.xlu0 %v495, 127
    %v864 = vpop.permute.xlu0 %863
    %865 = vrot.lane.b32.xlu0 %v500, 127
    %v866 = vpop.permute.xlu0 %865
    %867 = vrot.lane.b32.xlu0 %v505, 127
    %v868 = vpop.permute.xlu0 %867
    %869 = vrot.lane.b32.xlu0 %v510, 127
    %v870 = vpop.permute.xlu0 %869
    %871 = vrot.lane.b32.xlu0 %v515, 127
    %v872 = vpop.permute.xlu0 %871
    %873 = vrot.lane.b32.xlu0 %v520, 127
    %v874 = vpop.permute.xlu0 %873
    %875 = vrot.lane.b32.xlu0 %v525, 127
    %v876 = vpop.permute.xlu0 %875
    %877 = vrot.lane.b32.xlu0 %v530, 127
    %v878 = vpop.permute.xlu0 %877
    %879 = vrot.lane.b32.xlu0 %v535, 127
    %v880 = vpop.permute.xlu0 %879
    %881 = vrot.lane.b32.xlu0 %v540, 127
    %v882 = vpop.permute.xlu0 %881
    %883 = vrot.lane.b32.xlu0 %v545, 127
    %v884 = vpop.permute.xlu0 %883
    %885 = vrot.lane.b32.xlu0 %v550, 127
    %v886 = vpop.permute.xlu0 %885
    %887 = vrot.lane.b32.xlu0 %v555, 127
    %v888 = vpop.permute.xlu0 %887
    %889 = vrot.lane.b32.xlu0 %v560, 127
    %v890 = vpop.permute.xlu0 %889
    %891 = vrot.lane.b32.xlu0 %v565, 127
    %v892 = vpop.permute.xlu0 %891
    %893 = vrot.lane.b32.xlu0 %v570, 127
    %v894 = vpop.permute.xlu0 %893
    %895 = vrot.lane.b32.xlu0 %v575, 127
    %v896 = vpop.permute.xlu0 %895
    %897 = vrot.lane.b32.xlu0 %v580, 127
    %v898 = vpop.permute.xlu0 %897
    %899 = vrot.lane.b32.xlu0 %v585, 127
    %v900 = vpop.permute.xlu0 %899
    %901 = vrot.lane.b32.xlu0 %v590, 127
    %v902 = vpop.permute.xlu0 %901
    %903 = vrot.lane.b32.xlu0 %v595, 127
    %v904 = vpop.permute.xlu0 %903
    %905 = vrot.lane.b32.xlu0 %v600, 127
    %v906 = vpop.permute.xlu0 %905
    %907 = vrot.lane.b32.xlu0 %v605, 127
    %v908 = vpop.permute.xlu0 %907
    %909 = vrot.lane.b32.xlu0 %v610, 127
    %v910 = vpop.permute.xlu0 %909
    %911 = vrot.lane.b32.xlu0 %v615, 127
    %v912 = vpop.permute.xlu0 %911
    %913 = vrot.lane.b32.xlu0 %v620, 127
    %v914 = vpop.permute.xlu0 %913
    %915 = vrot.lane.b32.xlu0 %v625, 127
    %v916 = vpop.permute.xlu0 %915
    %949 = vxpose.xlu0.b32.start [1/16] %v854, 128
    %950 = vxpose.xlu0.b32.cont [2/16] %v856, 128
    %951 = vxpose.xlu0.b32.cont [3/16] %v858, 128
    %952 = vxpose.xlu0.b32.cont [4/16] %v860, 128
    %953 = vxpose.xlu0.b32.cont [5/16] %v862, 128
    %954 = vxpose.xlu0.b32.cont [6/16] %v864, 128
    %955 = vxpose.xlu0.b32.cont [7/16] %v866, 128
    %956 = vxpose.xlu0.b32.cont [8/16] %v868, 128
    %957 = vxpose.xlu0.b32.cont [9/16] %v870, 128
    %958 = vxpose.xlu0.b32.cont [10/16] %v872, 128
    %959 = vxpose.xlu0.b32.cont [11/16] %v874, 128
    %960 = vxpose.xlu0.b32.cont [12/16] %v876, 128
    %961 = vxpose.xlu0.b32.cont [13/16] %v878, 128
    %962 = vxpose.xlu0.b32.cont [14/16] %v880, 128
    %963 = vxpose.xlu0.b32.cont [15/16] %v882, 128
    %964 = vxpose.xlu0.b32.end [16/16] %v884, 128
    %v965 = vpop.trf.xlu0
    %v966 = vpop.trf.xlu0
    %v967 = vpop.trf.xlu0
    %v968 = vpop.trf.xlu0
    %v969 = vpop.trf.xlu0
    %v970 = vpop.trf.xlu0
    %v971 = vpop.trf.xlu0
    %v972 = vpop.trf.xlu0
    %v973 = vpop.trf.xlu0
    %v974 = vpop.trf.xlu0
    %v975 = vpop.trf.xlu0
    %v976 = vpop.trf.xlu0
    %v977 = vpop.trf.xlu0
    %v978 = vpop.trf.xlu0
    %v979 = vpop.trf.xlu0
    %v980 = vpop.trf.xlu0
    %981 = vxpose.xlu0.b32.start [1/16] %v886, 128
    %982 = vxpose.xlu0.b32.cont [2/16] %v888, 128
    %983 = vxpose.xlu0.b32.cont [3/16] %v890, 128
    %984 = vxpose.xlu0.b32.cont [4/16] %v892, 128
    %985 = vxpose.xlu0.b32.cont [5/16] %v894, 128
    %986 = vxpose.xlu0.b32.cont [6/16] %v896, 128
    %987 = vxpose.xlu0.b32.cont [7/16] %v898, 128
    %988 = vxpose.xlu0.b32.cont [8/16] %v900, 128
    %989 = vxpose.xlu0.b32.cont [9/16] %v902, 128
    %990 = vxpose.xlu0.b32.cont [10/16] %v904, 128
    %991 = vxpose.xlu0.b32.cont [11/16] %v906, 128
    %992 = vxpose.xlu0.b32.cont [12/16] %v908, 128
    %993 = vxpose.xlu0.b32.cont [13/16] %v910, 128
    %994 = vxpose.xlu0.b32.cont [14/16] %v912, 128
    %995 = vxpose.xlu0.b32.cont [15/16] %v914, 128
    %996 = vxpose.xlu0.b32.end [16/16] %v916, 128
    %v997 = vpop.trf.xlu0
    %v998 = vpop.trf.xlu0
    %v999 = vpop.trf.xlu0
    %v1000 = vpop.trf.xlu0
    %v1001 = vpop.trf.xlu0
    %v1002 = vpop.trf.xlu0
    %v1003 = vpop.trf.xlu0
    %v1004 = vpop.trf.xlu0
    %v1005 = vpop.trf.xlu0
    %v1006 = vpop.trf.xlu0
    %v1007 = vpop.trf.xlu0
    %v1008 = vpop.trf.xlu0
    %v1009 = vpop.trf.xlu0
    %v1010 = vpop.trf.xlu0
    %v1011 = vpop.trf.xlu0
    %v1012 = vpop.trf.xlu0
    %v1015 = vcombine.low %v965, %v997
    %v1017 = vunpack.c.l.s4 1966171168
    %v1018 = vunpack.c.0.s8 %v1017
    %v1019 = vlaneseq
    %v1020 = vshrl.u32 %v1019, 7
    %v1021 = vsub.s32 %v1018, %v1020
    %v1022 = vrot.slane %v1015, %v1021
    %v1024 = vunpack.c.l.s4 1966171168
    %v1025 = vunpack.c.0.s8 %v1024
    %v1026 = vlaneseq
    %v1027 = vshrl.u32 %v1026, 7
    %v1028 = vsub.s32 %v1025, %v1027
    %v1029 = vrot.slane %v1022, %v1028
    %v1031 = vlaneseq
    %vm1032 = vcmp.ge.s32.totalorder %v1031, 0
    %vm1033 = vcmp.lt.s32.totalorder %v1031, 256
    %vm1034 = vmand %vm1032, %vm1033
    %1035 = vst.msk [vmem:[#allocation6] sm:$0x3] %vm1034, %v1029
    // Predicated region
    $region18: #{tpu_custom_call.1} parent=1 // pred_check
      _
    $region19: #{tpu_custom_call.1} parent=1 // pred_check_branch
      %1037 = sbr.rel (0) target = $region21
    $region20: #{tpu_custom_call.1} parent=1 // pred_region
      %s1039 = ssub.s32 2048, 2048
      %1040 = vsyncadd [#allocation4], %s1039
      %s1041 = sshll.u32 [#allocation5], 4
      %s1042 = int_to_ptr.vmem [resolvable:$true] %s1041
      %1047 = dma.vmem_to_hbm [thread:$0]  %s1042, 2048, %s3, [#allocation4], 64, 64, 4
    $region21: #{tpu_custom_call.1} parent=1 // pred_fallthru
      _
    // Predicated region
    $region22: #{tpu_custom_call.1} parent=1 // pred_check
      _
    $region23: #{tpu_custom_call.1} parent=1 // pred_check_branch
      %1049 = sbr.rel (0) target = $region25
    $region24: #{tpu_custom_call.1} parent=1 // pred_region
      _
    $region25: #{tpu_custom_call.1} parent=1 // pred_fallthru
      _
    // Predicated region
    $region26: #{tpu_custom_call.1} parent=1 // pred_check
      _
    $region27: #{tpu_custom_call.1} parent=1 // pred_check_branch
      %1051 = sbr.rel (0) target = $region29
    $region28: #{tpu_custom_call.1} parent=1 // pred_region
      %s1053 = ssub.s32 32, 32
      %1054 = vsyncadd [#allocation7], %s1053
      %s1056 = sshll.u32 [#allocation6], 4
      %s1057 = int_to_ptr.vmem [resolvable:$true] %s1056
      %1059 = dma.vmem_to_hbm [thread:$0]  %s1057, 32, %s5, [#allocation7]
    $region29: #{tpu_custom_call.1} parent=1 // pred_fallthru
      _
    // Predicated region
    $region30: #{tpu_custom_call.1} parent=1 // pred_check
      _
    $region31: #{tpu_custom_call.1} parent=1 // pred_check_branch
      %1061 = sbr.rel (0) target = $region33
    $region32: #{tpu_custom_call.1} parent=1 // pred_region
      %1062 = dma.done [#allocation4], 2048
    $region33: #{tpu_custom_call.1} parent=1 // pred_fallthru
      _
    // Predicated region
    $region34: #{tpu_custom_call.1} parent=1 // pred_check
      _
    $region35: #{tpu_custom_call.1} parent=1 // pred_check_branch
      %1064 = sbr.rel (0) target = $region37
    $region36: #{tpu_custom_call.1} parent=1 // pred_region
      _
    $region37: #{tpu_custom_call.1} parent=1 // pred_fallthru
      _
    // Predicated region
    $region38: #{tpu_custom_call.1} parent=1 // pred_check
      _
    $region39: #{tpu_custom_call.1} parent=1 // pred_check_branch
      %1066 = sbr.rel (0) target = $region41
    $region40: #{tpu_custom_call.1} parent=1 // pred_region
      %1067 = dma.done [#allocation7], 32
    $region41: #{tpu_custom_call.1} parent=1 // pred_fallthru
      _
    %1068 = vsyncpa [#allocation3], 1
    %1069 = vsyncpa [#allocation4], 1
    %1070 = vsyncpa [#allocation7], 1

</llo_original>
